<compile_context>
chip_gen: v6e
topology: v6e:2x2x1
jax: 0.10.0
libtpu: 0.0.40
codegen_flags: <defaults>
</compile_context>

<pallas_src>
import functools

import jax
import jax.numpy as jnp
from jax.experimental import pallas as pl
from jax.experimental.pallas import tpu as pltpu


def _round_up(x, m):
    return (x + m - 1) // m * m


def _default_tm():
    # 256 matches the 256x256 MXU on v6e/v7x (and halves per-i weight
    # re-fetch); v5e's 4x128^2 MXU is already saturated at 128.
    try:
        kind = jax.devices()[0].device_kind.lower()
    except Exception:
        return 256
    if "v5 lite" in kind or "v5e" in kind or "v5litepod" in kind:
        return 128
    return 256


_TM = _default_tm()
_VMEM_LIMIT = 32 * 1024 * 1024  # explicit, safe on v5e/v6e (128 MiB) and v7x (64 MiB)


def _pick_tk(K, target=512, cap=1024):
    """K tile: multiple of 128 dividing round_up(K,128), closest to 512.
    Minimizes zero-padded K work (e.g. ASPP K=720 -> tk=384, not 512->Kp=1024)."""
    kp = _round_up(K, 128)
    if kp <= target:
        return kp
    q = kp // 128
    best = 128
    for d in range(1, q + 1):
        if q % d:
            continue
        cand = 128 * d
        if cand > cap:
            continue
        if (abs(cand - target), -cand) < (abs(best - target), -best):
            best = cand
    return best


def _gemm_tiles(M, K, N):
    tm = min(_TM, _round_up(M, 16))
    tn = min(256, _round_up(N, 128))
    tk = _pick_tk(K)
    return tm, tn, tk


# --------------------------------------------------------------------------
# Pallas kernels
# --------------------------------------------------------------------------
def _matmul_bias_kernel(x_ref, w_ref, b_ref, o_ref, acc_ref, *, nk):
    @pl.when(pl.program_id(2) == 0)
    def _():
        acc_ref[...] = jnp.zeros_like(acc_ref)

    acc_ref[...] += jnp.dot(x_ref[...], w_ref[...],
                            preferred_element_type=jnp.float32)

    @pl.when(pl.program_id(2) == nk - 1)
    def _():
        o_ref[...] = (acc_ref[...] + b_ref[...]).astype(o_ref.dtype)


def _matmul_stats_kernel(x_ref, w_ref, o_ref, stats_ref, acc_ref, *, nk):
    # Conv GEMM (bias-free) with BatchNorm statistics fused into the epilogue:
    # on the last K step, the fp32 accumulator tile is reduced to per-channel
    # sum / sum-of-squares partials (rows 0/1 of an 8-row slab per i-tile).
    # M-padding rows are exact zeros (bias-free conv on zero-padded input),
    # so they contribute nothing to the statistics.
    @pl.when(pl.program_id(2) == 0)
    def _():
        acc_ref[...] = jnp.zeros_like(acc_ref)

    acc_ref[...] += jnp.dot(x_ref[...], w_ref[...],
                            preferred_element_type=jnp.float32)

    @pl.when(pl.program_id(2) == nk - 1)
    def _():
        y = acc_ref[...]
        o_ref[...] = y.astype(o_ref.dtype)
        s = jnp.sum(y, axis=0, keepdims=True)        # (1, tn)
        sq = jnp.sum(y * y, axis=0, keepdims=True)   # (1, tn)
        row = jax.lax.broadcasted_iota(jnp.int32, (8, y.shape[1]), 0)
        packed = jnp.where(row == 0, s, jnp.where(row == 1, sq, 0.0))
        stats_ref[...] = packed[None]                # (1, 8, tn)


def _bn_apply_kernel(x_ref, scale_ref, shift_ref, o_ref, *, relu):
    y = x_ref[...].astype(jnp.float32) * scale_ref[...] + shift_ref[...]
    if relu:
        y = jnp.maximum(y, 0.0)
    o_ref[...] = y.astype(o_ref.dtype)


def _bn_apply_res_kernel(x_ref, res_ref, scale_ref, shift_ref, o_ref, *, relu):
    # BN normalize + residual add (+ ReLU) fused into one HBM pass
    y = x_ref[...].astype(jnp.float32) * scale_ref[...] + shift_ref[...]
    y = y + res_ref[...].astype(jnp.float32)
    if relu:
        y = jnp.maximum(y, 0.0)
    o_ref[...] = y.astype(o_ref.dtype)


# --------------------------------------------------------------------------
# GEMM wrappers
# --------------------------------------------------------------------------
@functools.partial(jax.jit, static_argnames=("out_dtype",))
def matmul_bias(x, w, b, *, out_dtype=jnp.bfloat16):
    """out = x @ w + b ; bf16 operands, fp32 MXU accumulate, tiled Pallas GEMM."""
    M, K = x.shape
    _, N = w.shape
    tm, tn, tk = _gemm_tiles(M, K, N)
    Mp, Np, Kp = _round_up(M, tm), _round_up(N, tn), _round_up(K, tk)
    xp = jnp.pad(x.astype(jnp.bfloat16), ((0, Mp - M), (0, Kp - K)))
    wp = jnp.pad(w.astype(jnp.bfloat16), ((0, Kp - K), (0, Np - N)))
    bp = jnp.pad(b.astype(jnp.float32).reshape(1, -1), ((0, 0), (0, Np - N)))
    grid = (Mp // tm, Np // tn, Kp // tk)
    out = pl.pallas_call(
        functools.partial(_matmul_bias_kernel, nk=grid[2]),
        out_shape=jax.ShapeDtypeStruct((Mp, Np), out_dtype),
        grid_spec=pltpu.PrefetchScalarGridSpec(
            num_scalar_prefetch=0,
            grid=grid,
            in_specs=[
                pl.BlockSpec((tm, tk), lambda i, j, k: (i, k)),
                pl.BlockSpec((tk, tn), lambda i, j, k: (k, j)),
                pl.BlockSpec((1, tn), lambda i, j, k: (0, j)),  # constant over k
            ],
            out_specs=pl.BlockSpec((tm, tn), lambda i, j, k: (i, j)),
            scratch_shapes=[pltpu.VMEM((tm, tn), jnp.float32)],
        ),
        compiler_params=pltpu.CompilerParams(
            dimension_semantics=("parallel", "parallel", "arbitrary"),
            vmem_limit_bytes=_VMEM_LIMIT),
    )(xp, wp, bp)
    if Mp != M or Np != N:
        out = out[:M, :N]
    return out


@jax.jit
def matmul_bn_stats(x, w):
    """out = x @ w (bias-free conv GEMM) plus fused per-channel sum / sumsq.
    Returns (out[M,N] bf16, sums[1,N] f32, sumsq[1,N] f32)."""
    M, K = x.shape
    _, N = w.shape
    tm, tn, tk = _gemm_tiles(M, K, N)
    Mp, Np, Kp = _round_up(M, tm), _round_up(N, tn), _round_up(K, tk)
    xp = jnp.pad(x.astype(jnp.bfloat16), ((0, Mp - M), (0, Kp - K)))
    wp = jnp.pad(w.astype(jnp.bfloat16), ((0, Kp - K), (0, Np - N)))
    grid = (Mp // tm, Np // tn, Kp // tk)
    out, stats = pl.pallas_call(
        functools.partial(_matmul_stats_kernel, nk=grid[2]),
        out_shape=(jax.ShapeDtypeStruct((Mp, Np), jnp.bfloat16),
                   jax.ShapeDtypeStruct((grid[0], 8, Np), jnp.float32)),
        grid_spec=pltpu.PrefetchScalarGridSpec(
            num_scalar_prefetch=0,
            grid=grid,
            in_specs=[
                pl.BlockSpec((tm, tk), lambda i, j, k: (i, k)),
                pl.BlockSpec((tk, tn), lambda i, j, k: (k, j)),
            ],
            out_specs=(pl.BlockSpec((tm, tn), lambda i, j, k: (i, j)),
                       pl.BlockSpec((1, 8, tn), lambda i, j, k: (i, 0, j))),
            scratch_shapes=[pltpu.VMEM((tm, tn), jnp.float32)],
        ),
        compiler_params=pltpu.CompilerParams(
            dimension_semantics=("parallel", "parallel", "arbitrary"),
            vmem_limit_bytes=_VMEM_LIMIT),
    )(xp, wp)
    sums = jnp.sum(stats[:, 0, :N], axis=0).reshape(1, N)
    ssqs = jnp.sum(stats[:, 1, :N], axis=0).reshape(1, N)
    if Mp != M or Np != N:
        out = out[:M, :N]
    return out, sums, ssqs


# --------------------------------------------------------------------------
# BatchNorm apply (stats come from the GEMM epilogue)
# --------------------------------------------------------------------------
def _bn_tile_m(M, C):
    t = (1 << 20) // max(1, 2 * C)          # ~1 MiB bf16 per block
    t = max(16, min(1024, t))
    t = min(t, _round_up(M, 16))
    return _round_up(t, 16)


@functools.partial(jax.jit, static_argnames=("relu",))
def bn_apply(x2d, sums, ssqs, residual=None, *, relu=False):
    """nn.BatchNorm2d (training mode, eps=1e-5, weight=1, bias=0) normalize,
    optionally fused with residual add + ReLU, tiled over M."""
    M, C = x2d.shape
    inv_m = 1.0 / float(M)
    mean = sums * inv_m
    var = jnp.maximum(ssqs * inv_m - mean * mean, 0.0)      # biased variance
    scale = jax.lax.rsqrt(var + 1e-5)                       # gamma = 1
    shift = -mean * scale                                   # beta  = 0

    tm = _bn_tile_m(M, C)
    Mp = _round_up(M, tm)
    xp = x2d if Mp == M else jnp.pad(x2d, ((0, Mp - M), (0, 0)))
    grid = (Mp // tm,)
    big = pl.BlockSpec((tm, C), lambda i: (i, 0))
    small = pl.BlockSpec((1, C), lambda i: (0, 0))

    if residual is None:
        kern = functools.partial(_bn_apply_kernel, relu=relu)
        in_specs = [big, small, small]
        args = (xp, scale, shift)
    else:
        rp = residual if Mp == M else jnp.pad(residual, ((0, Mp - M), (0, 0)))
        kern = functools.partial(_bn_apply_res_kernel, relu=relu)
        in_specs = [big, big, small, small]
        args = (xp, rp, scale, shift)

    out = pl.pallas_call(
        kern,
        out_shape=jax.ShapeDtypeStruct((Mp, C), jnp.bfloat16),
        grid_spec=pltpu.PrefetchScalarGridSpec(
            num_scalar_prefetch=0, grid=grid,
            in_specs=in_specs, out_specs=big),
        compiler_params=pltpu.CompilerParams(
            dimension_semantics=("parallel",),
            vmem_limit_bytes=_VMEM_LIMIT),
    )(*args)
    return out if Mp == M else out[:M]


# --------------------------------------------------------------------------
# Conv helpers (glue: im2col / reshapes)
# --------------------------------------------------------------------------
def _im2col(x, kh, kw, stride, padding, dilation):
    n, h, w, c = x.shape
    xp = jnp.pad(x, ((0, 0), (padding, padding), (padding, padding), (0, 0)))
    hp, wp = h + 2 * padding, w + 2 * padding
    ho = (hp - dilation * (kh - 1) - 1) // stride + 1
    wo = (wp - dilation * (kw - 1) - 1) // stride + 1
    cols = []
    for i in range(kh):
        for j in range(kw):
            r0, c0 = i * dilation, j * dilation
            patch = xp[:, r0:r0 + (ho - 1) * stride + 1:stride,
                          c0:c0 + (wo - 1) * stride + 1:stride, :]
            cols.append(patch)
    patches = jnp.concatenate(cols, axis=-1)  # (n, ho, wo, kh*kw*c), bf16
    return patches.reshape(n * ho * wo, kh * kw * c), (n, ho, wo)


# TODO(synk): 3x3/7x7 convs still materialize im2col patches in HBM (kh*kw x
# activation expansion, halved by bf16); keeping the tile resident in VMEM and
# accumulating 9 shifted matmuls needs overlapping-window / manual-DMA
# indexing and is left for a follow-up.
@functools.partial(jax.jit,
                   static_argnames=("stride", "padding", "dilation", "out_dtype"))
def conv2d(x, w, b=None, *, stride=1, padding=0, dilation=1,
           out_dtype=jnp.bfloat16):
    # Biased conv (no BN): x (N,H,W,Cin); w (kh,kw,Cin,Cout); b (Cout,) or None.
    kh, kw, cin, cout = w.shape
    patches, (n, ho, wo) = _im2col(x.astype(jnp.bfloat16),
                                   kh, kw, stride, padding, dilation)
    if b is None:
        b = jnp.zeros((cout,), jnp.float32)
    out = matmul_bias(patches, w.reshape(kh * kw * cin, cout), b,
                      out_dtype=out_dtype)
    return out.reshape(n, ho, wo, cout)


@functools.partial(jax.jit,
                   static_argnames=("stride", "padding", "dilation", "relu"))
def conv_bn(x, w, residual=None, *, stride=1, padding=0, dilation=1, relu=True):
    """conv(bias=False) + BatchNorm2d(train stats) [+ residual add] [+ ReLU].
    BN statistics are produced by the GEMM epilogue (no extra stats pass)."""
    kh, kw, cin, cout = w.shape
    patches, (n, ho, wo) = _im2col(x.astype(jnp.bfloat16),
                                   kh, kw, stride, padding, dilation)
    out2d, sums, ssqs = matmul_bn_stats(patches, w.reshape(kh * kw * cin, cout))
    r2d = None if residual is None else residual.reshape(n * ho * wo, cout)
    y2d = bn_apply(out2d, sums, ssqs, r2d, relu=relu)
    return y2d.reshape(n, ho, wo, cout)


# --------------------------------------------------------------------------
# Parameter construction (deterministic, synthetic)
# --------------------------------------------------------------------------
class ParamGen:
    def __init__(self, key):
        self.key = key
        self.count = 0

    def conv(self, kh, kw, cin, cout, std=None):
        self.count += 1
        k = jax.random.fold_in(self.key, self.count)
        if std is None:
            std = (2.0 / (kh * kw * cout)) ** 0.5  # kaiming_normal_, fan_out
        return std * jax.random.normal(k, (kh, kw, cin, cout), jnp.float32)

    def vec(self, n, std=0.01):
        self.count += 1
        k = jax.random.fold_in(self.key, self.count)
        return std * jax.random.normal(k, (n,), jnp.float32)


def make_bottleneck_params(pg, inplanes, planes, stride, downsample):
    width = planes  # base_width=64, groups=1
    p = {
        "conv1": pg.conv(1, 1, inplanes, width),
        "conv2": pg.conv(3, 3, width, width),
        "conv3": pg.conv(1, 1, width, planes * 4),
        "stride": stride,
    }
    if downsample:
        p["down"] = pg.conv(1, 1, inplanes, planes * 4)
    return p


def init_params(key):
    pg = ParamGen(key)
    backbone = {"conv1": pg.conv(7, 7, 3, 64)}
    inplanes = [64]

    def make_layer(planes, blocks, stride):
        layer = []
        downsample = (stride != 1) or (inplanes[0] != planes * 4)
        layer.append(make_bottleneck_params(pg, inplanes[0], planes, stride, downsample))
        inplanes[0] = planes * 4
        for _ in range(1, blocks):
            layer.append(make_bottleneck_params(pg, inplanes[0], planes, 1, False))
        return layer

    backbone["layer1"] = make_layer(64, 3, 1)
    backbone["layer2"] = make_layer(128, 4, 2)
    backbone["layer3"] = make_layer(256, 23, 2)
    backbone["layer4"] = make_layer(512, 3, 2)
    backbone["conv1x1_w"] = pg.conv(1, 1, 2048, 20)
    backbone["conv1x1_b"] = pg.vec(20)

    # TODO(synk): the original module feeds the 20-channel `mask` into
    # _ASPP(in_ch=2048, ...) which is a channel mismatch (would crash in torch);
    # the ASPP here is built with in_ch=20 so the forward is runnable.
    aspp_in = 20
    aspp_w = [pg.conv(3, 3, aspp_in, 21, std=0.01) for _ in range(4)]
    aspp_b = [jnp.zeros((21,), jnp.float32) for _ in range(4)]
    return {"backbone": backbone, "aspp_w": aspp_w, "aspp_b": aspp_b}


# --------------------------------------------------------------------------
# Model forward
# --------------------------------------------------------------------------
def bottleneck_forward(x, p):
    stride = p["stride"]
    out = conv_bn(x, p["conv1"], relu=True)                                 # 1x1 + bn1 + relu
    out = conv_bn(out, p["conv2"], stride=stride, padding=1, relu=True)     # 3x3 + bn2 + relu
    if "down" in p:
        identity = conv_bn(x, p["down"], stride=stride, relu=False)         # downsample + bn
    else:
        identity = x
    # 1x1 conv3 + bn3 + residual add + ReLU (add/ReLU fused in the BN pass)
    return conv_bn(out, p["conv3"], residual=identity, relu=True)


def backbone_forward(x, params):
    x = conv_bn(x, params["conv1"], stride=2, padding=3, relu=True)
    # nn.MaxPool2d(3, stride=2, padding=1) -- plain-JAX glue (not the hot path)
    x = jax.lax.reduce_window(x, jnp.array(-jnp.inf, x.dtype), jax.lax.max,
                              (1, 3, 3, 1), (1, 2, 2, 1),
                              ((0, 0), (1, 1), (1, 1), (0, 0)))
    for name in ("layer1", "layer2", "layer3", "layer4"):
        for blk in params[name]:
            x = bottleneck_forward(x, blk)
    mask = conv2d(x, params["conv1x1_w"], params["conv1x1_b"])
    return mask  # this is `feat32` (third return of ResNet._forward_impl)


def aspp_forward(feat, weights, biases, rates=(6, 12, 18, 24)):
    # sum_i conv_i(x)  ==  one GEMM on K-concatenated im2col patches & weights.
    # K=720 is tiled with the K-aware tk (384) so only ~6% of MXU K work is pad.
    patch_list, shape = [], None
    for rate in rates:
        p, shape = _im2col(feat.astype(jnp.bfloat16), 3, 3,
                           stride=1, padding=rate, dilation=rate)
        patch_list.append(p)
    patches = jnp.concatenate(patch_list, axis=1)
    w = jnp.concatenate([wi.reshape(-1, wi.shape[-1]) for wi in weights], axis=0)
    b = biases[0] + biases[1] + biases[2] + biases[3]
    out = matmul_bias(patches, w, b, out_dtype=jnp.float32)
    n, ho, wo = shape
    return out.reshape(n, ho, wo, -1)


def bilinear_align_corners(x, out_h, out_w):
    # F.interpolate(..., mode='bilinear', align_corners=True) -- plain-JAX glue
    n, h, w, c = x.shape

    def idx(size_in, size_out):
        if size_in == 1:
            z = jnp.zeros((size_out,), jnp.int32)
            return z, z, jnp.zeros((size_out,), jnp.float32)
        pos = jnp.arange(size_out, dtype=jnp.float32) * (size_in - 1) / (size_out - 1)
        i0 = jnp.clip(jnp.floor(pos).astype(jnp.int32), 0, size_in - 2)
        return i0, i0 + 1, pos - i0.astype(jnp.float32)

    y0, y1, wy = idx(h, out_h)
    x0, x1, wx = idx(w, out_w)
    top = x[:, y0]
    bot = x[:, y1]
    wx_ = wx[None, None, :, None]
    top = top[:, :, x0] * (1.0 - wx_) + top[:, :, x1] * wx_
    bot = bot[:, :, x0] * (1.0 - wx_) + bot[:, :, x1] * wx_
    wy_ = wy[None, :, None, None]
    return top * (1.0 - wy_) + bot * wy_


def deeplab_forward(x_nchw, params):
    n, c, h, w = x_nchw.shape
    x = jnp.transpose(x_nchw, (0, 2, 3, 1)).astype(jnp.bfloat16)  # NCHW -> NHWC
    feat32 = backbone_forward(x, params["backbone"])              # (N, H/32, W/32, 20)
    logits = aspp_forward(feat32, params["aspp_w"], params["aspp_b"])
    logits = bilinear_align_corners(logits.astype(jnp.float32), h, w)
    return jnp.transpose(logits, (0, 3, 1, 2))                    # back to NCHW


# --------------------------------------------------------------------------
if __name__ == "__main__":
    key = jax.random.PRNGKey(0)
    pkey, xkey = jax.random.split(key)
    params = init_params(pkey)

    # Small but valid shape: conv1 needs 3 input channels; 64x64 gives a 2x2 feat32.
    x = jax.random.normal(xkey, (2, 3, 64, 64), jnp.float32)

    out = deeplab_forward(x, params)
    out = jax.block_until_ready(out)

    assert out.shape == (2, 21, 64, 64), out.shape
    assert bool(jnp.all(jnp.isfinite(out)))
    print("KERNEL_OK")
</pallas_src>

<mosaic_0001>
module attributes {stable_mosaic.version = 11 : i64} {
  func.func @_matmul_stats_kernel(%arg0: i32, %arg1: i32, %arg2: i32, %arg3: memref<256x256xbf16, #tpu.memory_space<vmem>>, %arg4: memref<256x128xbf16, #tpu.memory_space<vmem>>, %arg5: memref<256x128xbf16, #tpu.memory_space<vmem>>, %arg6: memref<1x8x128xf32, #tpu.memory_space<vmem>>, %arg7: memref<256x128xf32, #tpu.memory_space<vmem>>) attributes {dimension_semantics = [#tpu.dimension_semantics<parallel>, #tpu.dimension_semantics<parallel>, #tpu.dimension_semantics<arbitrary>], iteration_bounds = array<i64: 8, 1, 1>, scalar_prefetch = 0 : i64, scratch_operands = 1 : i64, tpu.core_type = #tpu.core_type<tc>, window_params = [{transform_indices = @transform_0, window_bounds = array<i64: 256, 256>}, {transform_indices = @transform_1, window_bounds = array<i64: 256, 128>}, {transform_indices = @transform_2, window_bounds = array<i64: 256, 128>}, {transform_indices = @transform_3, window_bounds = array<i64: 1, 8, 128>}]} {
    %c0_i32 = arith.constant 0 : i32
    %0 = arith.cmpi eq, %arg2, %c0_i32 : i32
    %1 = arith.extui %0 : i1 to i32
    %c0_i32_0 = arith.constant 0 : i32
    %2 = arith.cmpi ne, %1, %c0_i32_0 : i32
    scf.if %2 {
      %cst_10 = arith.constant 0.000000e+00 : f32
      %12 = vector.broadcast %cst_10 : f32 to vector<256x128xf32>
      %c0_11 = arith.constant 0 : index
      %c0_12 = arith.constant 0 : index
      %13 = vector.load %arg7[%c0_11, %c0_12] : memref<256x128xf32, #tpu.memory_space<vmem>>, vector<256x128xf32>
      tpu.vector_store %arg7[%c0_11, %c0_12], %12 {strides = array<i32>} : memref<256x128xf32, #tpu.memory_space<vmem>>, vector<256x128xf32>,
    } else {
    }
    %c0 = arith.constant 0 : index
    %c0_1 = arith.constant 0 : index
    %3 = vector.load %arg7[%c0, %c0_1] : memref<256x128xf32, #tpu.memory_space<vmem>>, vector<256x128xf32>
    %c0_2 = arith.constant 0 : index
    %c0_3 = arith.constant 0 : index
    %4 = vector.load %arg3[%c0_2, %c0_3] : memref<256x256xbf16, #tpu.memory_space<vmem>>, vector<256x256xbf16>
    %c0_4 = arith.constant 0 : index
    %c0_5 = arith.constant 0 : index
    %5 = vector.load %arg4[%c0_4, %c0_5] : memref<256x128xbf16, #tpu.memory_space<vmem>>, vector<256x128xbf16>
    %cst = arith.constant dense<0.000000e+00> : vector<256x128xf32>
    %6 = tpu.matmul %4, %5, %cst {dimension_numbers = #tpu.dot_dimension_numbers<[1], [0], [0], [1], [0, 0, 1, 1], [], []>} : vector<256x256xbf16>, vector<256x128xbf16>, vector<256x128xf32> -> vector<256x128xf32>
    %7 = arith.addf %3, %6 : vector<256x128xf32>
    %c0_6 = arith.constant 0 : index
    %c0_7 = arith.constant 0 : index
    %8 = vector.load %arg7[%c0_6, %c0_7] : memref<256x128xf32, #tpu.memory_space<vmem>>, vector<256x128xf32>
    tpu.vector_store %arg7[%c0_6, %c0_7], %7 {strides = array<i32>} : memref<256x128xf32, #tpu.memory_space<vmem>>, vector<256x128xf32>,
    %c0_i32_8 = arith.constant 0 : i32
    %9 = arith.cmpi eq, %arg2, %c0_i32_8 : i32
    %10 = arith.extui %9 : i1 to i32
    %c0_i32_9 = arith.constant 0 : i32
    %11 = arith.cmpi ne, %10, %c0_i32_9 : i32
    scf.if %11 {
      %c0_10 = arith.constant 0 : index
      %c0_11 = arith.constant 0 : index
      %12 = vector.load %arg7[%c0_10, %c0_11] : memref<256x128xf32, #tpu.memory_space<vmem>>, vector<256x128xf32>
      %13 = arith.truncf %12 : vector<256x128xf32> to vector<256x128xbf16>
      %c0_12 = arith.constant 0 : index
      %c0_13 = arith.constant 0 : index
      %14 = vector.load %arg5[%c0_12, %c0_13] : memref<256x128xbf16, #tpu.memory_space<vmem>>, vector<256x128xbf16>
      tpu.vector_store %arg5[%c0_12, %c0_13], %13 {strides = array<i32>} : memref<256x128xbf16, #tpu.memory_space<vmem>>, vector<256x128xbf16>,
      %cst_14 = arith.constant dense<0.000000e+00> : vector<128xf32>
      %15 = vector.multi_reduction <add>, %12, %cst_14 [0] : vector<256x128xf32> to vector<128xf32>
      %16 = vector.shape_cast %15 : vector<128xf32> to vector<1x128xf32>
      %17 = arith.mulf %12, %12 : vector<256x128xf32>
      %cst_15 = arith.constant dense<0.000000e+00> : vector<128xf32>
      %18 = vector.multi_reduction <add>, %17, %cst_15 [0] : vector<256x128xf32> to vector<128xf32>
      %19 = vector.shape_cast %18 : vector<128xf32> to vector<1x128xf32>
      %20 = tpu.iota {dimensions = array<i32: 0>} : vector<8x128xi32>
      %c0_i32_16 = arith.constant 0 : i32
      %21 = vector.broadcast %c0_i32_16 : i32 to vector<8x128xi32>
      %22 = arith.cmpi eq, %20, %21 : vector<8x128xi32>
      %c1_i32 = arith.constant 1 : i32
      %23 = vector.broadcast %c1_i32 : i32 to vector<8x128xi32>
      %24 = arith.cmpi eq, %20, %23 : vector<8x128xi32>
      %cst_17 = arith.constant 0.000000e+00 : f32
      %25 = vector.shape_cast %19 : vector<1x128xf32> to vector<1x128xf32>
      %26 = vector.broadcast %25 : vector<1x128xf32> to vector<8x128xf32>
      %27 = vector.broadcast %cst_17 : f32 to vector<8x128xf32>
      %28 = arith.select %24, %26, %27 : vector<8x128xi1>, vector<8x128xf32>
      %29 = vector.shape_cast %16 : vector<1x128xf32> to vector<1x128xf32>
      %30 = vector.broadcast %29 : vector<1x128xf32> to vector<8x128xf32>
      %31 = arith.select %22, %30, %28 : vector<8x128xi1>, vector<8x128xf32>
      %32 = vector.shape_cast %31 : vector<8x128xf32> to vector<1x8x128xf32>
      %c0_18 = arith.constant 0 : index
      %c0_19 = arith.constant 0 : index
      %c0_20 = arith.constant 0 : index
      %33 = vector.load %arg6[%c0_18, %c0_19, %c0_20] : memref<1x8x128xf32, #tpu.memory_space<vmem>>, vector<1x8x128xf32>
      tpu.vector_store %arg6[%c0_18, %c0_19, %c0_20], %32 {strides = array<i32>} : memref<1x8x128xf32, #tpu.memory_space<vmem>>, vector<1x8x128xf32>,
    } else {
    }
    return
  }
  func.func @transform_0(%arg0: i32, %arg1: i32, %arg2: i32) -> (i32, i32) {
    %c0_i32 = arith.constant 0 : i32
    return %arg0, %arg2 : i32, i32
  }
  func.func @transform_1(%arg0: i32, %arg1: i32, %arg2: i32) -> (i32, i32) {
    %c0_i32 = arith.constant 0 : i32
    return %arg2, %arg1 : i32, i32
  }
  func.func @transform_2(%arg0: i32, %arg1: i32, %arg2: i32) -> (i32, i32) {
    %c0_i32 = arith.constant 0 : i32
    return %arg0, %arg1 : i32, i32
  }
  func.func @transform_3(%arg0: i32, %arg1: i32, %arg2: i32) -> (i32, i32, i32) {
    %c0_i32 = arith.constant 0 : i32
    %c0_i32_0 = arith.constant 0 : i32
    return %arg0, %c0_i32, %arg1 : i32, i32, i32
  }
}

</mosaic_0001>

<llo_original>
// kernel: matmul_bn_stats.1
$region0: #{matmul_bn_stats.1}
  #allocation0 [shape = 'u32[]', space=smem, size = 0x4, offset = 0x4, fixed_abs, tag = 'smem constant byte address 0x4 - core index']
  #allocation1 [shape = 'u32[144,128]{1,0:T(1,128)}', space=vmem, size = 0x12000, scoped, tag = 'internal scratch']
  #allocation2 [shape = 'f32[256,128]{1,0:T(8,128)}', space=vmem, size = 0x20000, scoped, tag = 'scratch operand']
  %s0 = inlined_call_operand.vmem [shape: bf16[2048,256], index: 0, kind: input, shape index: {}]
  %s1 = inlined_call_operand.vmem [shape: bf16[256,128], index: 1, kind: input, shape index: {}]
  %s2 = inlined_call_operand.vmem [shape: bf16[2048,128], index: 2, kind: output, shape index: {0}]
  %s3 = inlined_call_operand.vmem [shape: f32[8,8,128], index: 3, kind: output, shape index: {1}]
  %4 = xla_tuple %s2, %s3
  %s5 = sld [smem:[#allocation0]]
  $region57: #{matmul_bn_stats.1} parent=0
    _
  %s7 = ssub.s32 1, %s5
  %s8 = scalar_select 0, %s7, %s5
  loop: start=0, step=1, limit=10
  $region2: #{matmul_bn_stats.1} parent=0 // loop_pre_header
    _
  $region3: #{matmul_bn_stats.1} parent=0 // loop_header
    %s10 = sphi 0, %s14
    %p11 = scmp.ge.s32.totalorder %s10, 10
    %s17 = sphi 0, %s36
    %s18 = sphi 0, %s32
    %s19 = sphi 0, %s28
    %s20 = sphi 0, %s17
    %s21 = sphi 0, %s18
    %s22 = sphi 0, %s19
    %s23 = sphi 0, %s20
    %s24 = sphi 0, %s21
    %s25 = sphi 0, %s22
    %s41 = sphi 0, %s43
    %s44 = sphi 0, %s41
    %s45 = sphi 0, %s44
    %s61 = sphi 0, %s45
    %s69 = sphi 0, %s71
    %s72 = sphi 0, %s69
    %s73 = sphi 0, %s72
    %s89 = sphi 0, %s73
    %s97 = sphi 0, %s99
    %s100 = sphi 0, %s97
    %s101 = sphi 0, %s100
    %s117 = sphi 0, %s101
    %s125 = sphi 0, %s127
    %s128 = sphi 0, %s125
    %s129 = sphi 0, %s128
    %s145 = sphi 0, %s129
  $region4: #{matmul_bn_stats.1} parent=0 // loop_header_branch
    %13 = sbr.rel (%p11) target = $region8
  $region5: #{matmul_bn_stats.1} parent=0 // loop_body
    %s15 = ssub.s32 %s10, 1
    %s16 = ssub.s32 %s10, 2
    %s26 = sadd.s32 1, %s19
    %p27 = scmp.ge.s32.totalorder %s26, 1
    %s28 = scalar_select %p27, 0, %s26
    %s29 = sadd.s32 1, %s18
    %s30 = scalar_select %p27, %s29, %s18
    %p31 = scmp.ge.s32.totalorder %s30, 1
    %s32 = scalar_select %p31, 0, %s30
    %s33 = sadd.s32 1, %s17
    %s34 = scalar_select %p31, %s33, %s17
    %p35 = scmp.ge.s32.totalorder %s34, 8
    %s36 = scalar_select %p35, 0, %s34
    %s37 = ssub.s32 %s17, %s36
    %s38 = ssub.s32 %s19, %s28
    %s39 = sor.u32 %s37, %s38
    %p40 = scmp.eq.s32.totalorder %s39, 0
    %s42 = sadd.s32 %s41, 1
    %s43 = scalar_select %p40, %s41, %s42
    %p46 = pneg %p40
    %p47 = scmp.eq.s32.totalorder %s10, 7
    %p48 = por %p46, %p47
    %p49 = scmp.ne.s32.totalorder %s41, %s44
    %p50 = scmp.eq.s32.totalorder %s10, 0
    %p51 = por %p49, %p50
    %p52 = scmp.ne.s32.totalorder %s41, %s44
    %p53 = scmp.eq.s32.totalorder %s15, 7
    %p54 = por %p52, %p53
    %p55 = scmp.ne.s32.totalorder %s44, %s45
    %p56 = scmp.eq.s32.totalorder %s15, 0
    %p57 = por %p55, %p56
    %p58 = scmp.ne.s32.totalorder %s44, %s45
    %p59 = scmp.eq.s32.totalorder %s16, 7
    %p60 = por %p58, %p59
    %p62 = scmp.ne.s32.totalorder %s45, %s61
    %p63 = scmp.eq.s32.totalorder %s16, 0
    %p64 = por %p62, %p63
    %s65 = ssub.s32 %s19, %s28
    %s66 = ssub.s32 %s18, %s32
    %s67 = sor.u32 %s65, %s66
    %p68 = scmp.eq.s32.totalorder %s67, 0
    %s70 = sadd.s32 %s69, 1
    %s71 = scalar_select %p68, %s69, %s70
    %p74 = pneg %p68
    %p75 = scmp.eq.s32.totalorder %s10, 7
    %p76 = por %p74, %p75
    %p77 = scmp.ne.s32.totalorder %s69, %s72
    %p78 = scmp.eq.s32.totalorder %s10, 0
    %p79 = por %p77, %p78
    %p80 = scmp.ne.s32.totalorder %s69, %s72
    %p81 = scmp.eq.s32.totalorder %s15, 7
    %p82 = por %p80, %p81
    %p83 = scmp.ne.s32.totalorder %s72, %s73
    %p84 = scmp.eq.s32.totalorder %s15, 0
    %p85 = por %p83, %p84
    %p86 = scmp.ne.s32.totalorder %s72, %s73
    %p87 = scmp.eq.s32.totalorder %s16, 7
    %p88 = por %p86, %p87
    %p90 = scmp.ne.s32.totalorder %s73, %s89
    %p91 = scmp.eq.s32.totalorder %s16, 0
    %p92 = por %p90, %p91
    %s93 = ssub.s32 %s17, %s36
    %s94 = ssub.s32 %s18, %s32
    %s95 = sor.u32 %s93, %s94
    %p96 = scmp.eq.s32.totalorder %s95, 0
    %s98 = sadd.s32 %s97, 1
    %s99 = scalar_select %p96, %s97, %s98
    %p102 = pneg %p96
    %p103 = scmp.eq.s32.totalorder %s10, 7
    %p104 = por %p102, %p103
    %p105 = scmp.ne.s32.totalorder %s97, %s100
    %p106 = scmp.eq.s32.totalorder %s10, 0
    %p107 = por %p105, %p106
    %p108 = scmp.ne.s32.totalorder %s97, %s100
    %p109 = scmp.eq.s32.totalorder %s15, 7
    %p110 = por %p108, %p109
    %p111 = scmp.ne.s32.totalorder %s100, %s101
    %p112 = scmp.eq.s32.totalorder %s15, 0
    %p113 = por %p111, %p112
    %p114 = scmp.ne.s32.totalorder %s100, %s101
    %p115 = scmp.eq.s32.totalorder %s16, 7
    %p116 = por %p114, %p115
    %p118 = scmp.ne.s32.totalorder %s101, %s117
    %p119 = scmp.eq.s32.totalorder %s16, 0
    %p120 = por %p118, %p119
    %s121 = ssub.s32 %s17, %s36
    %s122 = ssub.s32 %s18, %s32
    %s123 = sor.u32 %s121, %s122
    %p124 = scmp.eq.s32.totalorder %s123, 0
    %s126 = sadd.s32 %s125, 1
    %s127 = scalar_select %p124, %s125, %s126
    %p130 = pneg %p124
    %p131 = scmp.eq.s32.totalorder %s10, 7
    %p132 = por %p130, %p131
    %p133 = scmp.ne.s32.totalorder %s125, %s128
    %p134 = scmp.eq.s32.totalorder %s10, 0
    %p135 = por %p133, %p134
    %p136 = scmp.ne.s32.totalorder %s125, %s128
    %p137 = scmp.eq.s32.totalorder %s15, 7
    %p138 = por %p136, %p137
    %p139 = scmp.ne.s32.totalorder %s128, %s129
    %p140 = scmp.eq.s32.totalorder %s15, 0
    %p141 = por %p139, %p140
    %p142 = scmp.ne.s32.totalorder %s128, %s129
    %p143 = scmp.eq.s32.totalorder %s16, 7
    %p144 = por %p142, %p143
    %p146 = scmp.ne.s32.totalorder %s129, %s145
    %p147 = scmp.eq.s32.totalorder %s16, 0
    %p148 = por %p146, %p147
    %p149 = scmp.le.s32.totalorder 1, %s10
    %p150 = scmp.lt.s32.totalorder %s10, 9
    %p151 = pnand %p149, %p150
    %p152 = pneg %p151
    // Predicated region
    $region9: #{matmul_bn_stats.1} parent=5 // pred_check
      _
    $region10: #{matmul_bn_stats.1} parent=5 // pred_check_branch
      %154 = sbr.rel (%p151) target = $region12
    $region11: #{matmul_bn_stats.1} parent=5 // pred_region
      %s155 = ssub.s32 %s10, 1
      // Predicated region
      $region13: #{matmul_bn_stats.1} parent=11 // pred_check
        %p156 = pneg %p85
      $region14: #{matmul_bn_stats.1} parent=11 // pred_check_branch
        %158 = sbr.rel (%p156) target = $region16
      $region15: #{matmul_bn_stats.1} parent=11 // pred_region
        %s159 = smul.u32 32, %s22
        %p160 = scmp.lt.s32.totalorder %s159, 31
        %s161 = scalar_select %p160, %s159, 31
        %p162 = scmp.lt.s32.totalorder %s21, 0
        %s163 = scalar_select %p162, %s21, 0
        %s164 = sadd.s32 %s163, %s161
        %s165 = smul.addr %s164, 4
        %s166 = scalar_lea.vmem %s1, %s165
        %s167 = smul.u32 32, %s22
      $region16: #{matmul_bn_stats.1} parent=11 // pred_fallthru
        _
    $region12: #{matmul_bn_stats.1} parent=5 // pred_fallthru
      _
    %p168 = scmp.lt.s32.totalorder %s10, 8
    // Predicated region
    $region17: #{matmul_bn_stats.1} parent=5 // pred_check
      %p169 = pneg %p168
    $region18: #{matmul_bn_stats.1} parent=5 // pred_check_branch
      %171 = sbr.rel (%p169) target = $region20
    $region19: #{matmul_bn_stats.1} parent=5 // pred_region
      // Predicated region
      $region21: #{matmul_bn_stats.1} parent=19 // pred_check
        %p172 = pneg %p51
      $region22: #{matmul_bn_stats.1} parent=19 // pred_check_branch
        %174 = sbr.rel (%p172) target = $region24
      $region23: #{matmul_bn_stats.1} parent=19 // pred_region
        %s175 = smul.u32 32, %s17
        %s176 = smul.u32 2, %s19
        %p177 = scmp.lt.s32.totalorder %s175, 255
        %s178 = scalar_select %p177, %s175, 255
        %p179 = scmp.lt.s32.totalorder %s176, 1
        %s180 = scalar_select %p179, %s176, 1
        %s181 = smul.addr %s178, 2
        %s182 = sadd.s32 %s180, %s181
        %s183 = smul.addr %s182, 4
        %s184 = scalar_lea.vmem %s0, %s183
        %s185 = smul.u32 32, %s17
        %s186 = smul.u32 2, %s19
      $region24: #{matmul_bn_stats.1} parent=19 // pred_fallthru
        _
    $region20: #{matmul_bn_stats.1} parent=5 // pred_fallthru
      _
    %p187 = scmp.le.s32.totalorder 1, %s10
    %p188 = scmp.lt.s32.totalorder %s10, 9
    %p189 = pnand %p187, %p188
    %p190 = pneg %p189
    // Predicated region
    $region25: #{matmul_bn_stats.1} parent=5 // pred_check
      _
    $region26: #{matmul_bn_stats.1} parent=5 // pred_check_branch
      %192 = sbr.rel (%p189) target = $region28
    $region27: #{matmul_bn_stats.1} parent=5 // pred_region
      %s193 = ssub.s32 %s10, 1
      %s194 = smul.u32 32, %s20
      %s195 = smul.u32 2, %s22
      %p196 = scmp.lt.s32.totalorder %s194, 255
      %s197 = scalar_select %p196, %s194, 255
      %p198 = scmp.lt.s32.totalorder %s195, 1
      %s199 = scalar_select %p198, %s195, 1
      %s200 = smul.addr %s197, 2
      %s201 = sadd.s32 %s199, %s200
      %s202 = smul.addr %s201, 4
      %s203 = scalar_lea.vmem %s0, %s202
      %p204 = pneg %p57
      %p205 = pneg %p54
      %s206 = smul.u32 32, %s22
      %p207 = scmp.lt.s32.totalorder %s206, 31
      %s208 = scalar_select %p207, %s206, 31
      %p209 = scmp.lt.s32.totalorder %s21, 0
      %s210 = scalar_select %p209, %s21, 0
      %s211 = sadd.s32 %s210, %s208
      %s212 = smul.addr %s211, 4
      %s213 = scalar_lea.vmem %s1, %s212
      %p214 = pneg %p85
      %p215 = pneg %p82
      %p216 = pneg %p113
      %p217 = pneg %p110
      %s218 = smul.u32 32, %s20
      %p219 = scmp.lt.s32.totalorder %s218, 255
      %s220 = scalar_select %p219, %s218, 255
      %p221 = scmp.lt.s32.totalorder %s21, 0
      %s222 = scalar_select %p221, %s21, 0
      %s223 = sadd.s32 %s222, %s220
      %s224 = smul.addr %s223, 4
      %s225 = scalar_lea.vmem %s2, %s224
      %p226 = pneg %p141
      %p227 = pneg %p138
      %p228 = scmp.lt.s32.totalorder %s20, 7
      %s229 = scalar_select %p228, %s20, 7
      %p230 = scmp.lt.s32.totalorder %s21, 0
      %s231 = scalar_select %p230, %s21, 0
      %s232 = sadd.s32 %s231, %s229
      %s233 = smul.addr %s232, 8
      %s234 = scalar_lea.vmem %s3, %s233
      %s235 = smul.u32 32, %s20
      %s236 = smul.u32 2, %s22
      %p237 = scmp.lt.s32.totalorder %s235, 255
      %s238 = scalar_select %p237, %s235, 255
      %p239 = scmp.lt.s32.totalorder %s236, 1
      %s240 = scalar_select %p239, %s236, 1
      %s241 = smul.addr %s238, 2
      %s242 = sadd.s32 %s240, %s241
      %s243 = smul.addr %s242, 4
      %s244 = scalar_lea.vmem %s0, %s243
      %s245 = smul.u32 32, %s20
      %s246 = smul.u32 2, %s22
      %s247 = smul.u32 32, %s22
      %p248 = scmp.lt.s32.totalorder %s247, 31
      %s249 = scalar_select %p248, %s247, 31
      %p250 = scmp.lt.s32.totalorder %s21, 0
      %s251 = scalar_select %p250, %s21, 0
      %s252 = sadd.s32 %s251, %s249
      %s253 = smul.addr %s252, 4
      %s254 = scalar_lea.vmem %s1, %s253
      %s255 = smul.u32 32, %s22
      %s256 = smul.u32 32, %s20
      %p257 = scmp.lt.s32.totalorder %s256, 255
      %s258 = scalar_select %p257, %s256, 255
      %p259 = scmp.lt.s32.totalorder %s21, 0
      %s260 = scalar_select %p259, %s21, 0
      %s261 = sadd.s32 %s260, %s258
      %s262 = smul.addr %s261, 4
      %s263 = scalar_lea.vmem %s2, %s262
      %s264 = smul.u32 32, %s20
      %p265 = scmp.lt.s32.totalorder %s20, 7
      %s266 = scalar_select %p265, %s20, 7
      %p267 = scmp.lt.s32.totalorder %s21, 0
      %s268 = scalar_select %p267, %s21, 0
      %s269 = sadd.s32 %s268, %s266
      %s270 = smul.addr %s269, 8
      %s271 = scalar_lea.vmem %s3, %s270
      %p273 = scmp.eq.s32.totalorder %s22, 0
      // Predicated region
      $region29: #{matmul_bn_stats.1} parent=27 // pred_check
        %p274 = pneg %p273
      $region30: #{matmul_bn_stats.1} parent=27 // pred_check_branch
        %276 = sbr.rel (%p274) target = $region32
      $region31: #{matmul_bn_stats.1} parent=27 // pred_region
        %277 = vst [vmem:[#allocation2] sm:$0xff] 0.0
        %278 = vst [vmem:[#allocation2 + $0x8] sm:$0xff] 0.0
        %279 = vst [vmem:[#allocation2 + $0x10] sm:$0xff] 0.0
        %280 = vst [vmem:[#allocation2 + $0x18] sm:$0xff] 0.0
        %281 = vst [vmem:[#allocation2 + $0x20] sm:$0xff] 0.0
        %282 = vst [vmem:[#allocation2 + $0x28] sm:$0xff] 0.0
        %283 = vst [vmem:[#allocation2 + $0x30] sm:$0xff] 0.0
        %284 = vst [vmem:[#allocation2 + $0x38] sm:$0xff] 0.0
        %285 = vst [vmem:[#allocation2 + $0x40] sm:$0xff] 0.0
        %286 = vst [vmem:[#allocation2 + $0x48] sm:$0xff] 0.0
        %287 = vst [vmem:[#allocation2 + $0x50] sm:$0xff] 0.0
        %288 = vst [vmem:[#allocation2 + $0x58] sm:$0xff] 0.0
        %289 = vst [vmem:[#allocation2 + $0x60] sm:$0xff] 0.0
        %290 = vst [vmem:[#allocation2 + $0x68] sm:$0xff] 0.0
        %291 = vst [vmem:[#allocation2 + $0x70] sm:$0xff] 0.0
        %292 = vst [vmem:[#allocation2 + $0x78] sm:$0xff] 0.0
        %293 = vst [vmem:[#allocation2 + $0x80] sm:$0xff] 0.0
        %294 = vst [vmem:[#allocation2 + $0x88] sm:$0xff] 0.0
        %295 = vst [vmem:[#allocation2 + $0x90] sm:$0xff] 0.0
        %296 = vst [vmem:[#allocation2 + $0x98] sm:$0xff] 0.0
        %297 = vst [vmem:[#allocation2 + $0xa0] sm:$0xff] 0.0
        %298 = vst [vmem:[#allocation2 + $0xa8] sm:$0xff] 0.0
        %299 = vst [vmem:[#allocation2 + $0xb0] sm:$0xff] 0.0
        %300 = vst [vmem:[#allocation2 + $0xb8] sm:$0xff] 0.0
        %301 = vst [vmem:[#allocation2 + $0xc0] sm:$0xff] 0.0
        %302 = vst [vmem:[#allocation2 + $0xc8] sm:$0xff] 0.0
        %303 = vst [vmem:[#allocation2 + $0xd0] sm:$0xff] 0.0
        %304 = vst [vmem:[#allocation2 + $0xd8] sm:$0xff] 0.0
        %305 = vst [vmem:[#allocation2 + $0xe0] sm:$0xff] 0.0
        %306 = vst [vmem:[#allocation2 + $0xe8] sm:$0xff] 0.0
        %307 = vst [vmem:[#allocation2 + $0xf0] sm:$0xff] 0.0
        %308 = vst [vmem:[#allocation2 + $0xf8] sm:$0xff] 0.0
      $region32: #{matmul_bn_stats.1} parent=27 // pred_fallthru
        _
      %v309 = vld [vmem:[#allocation2] sm:$0xff]
      %v310 = vld [vmem:[#allocation2 + $0x8] sm:$0xff]
      %v311 = vld [vmem:[#allocation2 + $0x10] sm:$0xff]
      %v312 = vld [vmem:[#allocation2 + $0x18] sm:$0xff]
      %v313 = vld [vmem:[#allocation2 + $0x20] sm:$0xff]
      %v314 = vld [vmem:[#allocation2 + $0x28] sm:$0xff]
      %v315 = vld [vmem:[#allocation2 + $0x30] sm:$0xff]
      %v316 = vld [vmem:[#allocation2 + $0x38] sm:$0xff]
      %v317 = vld [vmem:[#allocation2 + $0x40] sm:$0xff]
      %v318 = vld [vmem:[#allocation2 + $0x48] sm:$0xff]
      %v319 = vld [vmem:[#allocation2 + $0x50] sm:$0xff]
      %v320 = vld [vmem:[#allocation2 + $0x58] sm:$0xff]
      %v321 = vld [vmem:[#allocation2 + $0x60] sm:$0xff]
      %v322 = vld [vmem:[#allocation2 + $0x68] sm:$0xff]
      %v323 = vld [vmem:[#allocation2 + $0x70] sm:$0xff]
      %v324 = vld [vmem:[#allocation2 + $0x78] sm:$0xff]
      %v325 = vld [vmem:[#allocation2 + $0x80] sm:$0xff]
      %v326 = vld [vmem:[#allocation2 + $0x88] sm:$0xff]
      %v327 = vld [vmem:[#allocation2 + $0x90] sm:$0xff]
      %v328 = vld [vmem:[#allocation2 + $0x98] sm:$0xff]
      %v329 = vld [vmem:[#allocation2 + $0xa0] sm:$0xff]
      %v330 = vld [vmem:[#allocation2 + $0xa8] sm:$0xff]
      %v331 = vld [vmem:[#allocation2 + $0xb0] sm:$0xff]
      %v332 = vld [vmem:[#allocation2 + $0xb8] sm:$0xff]
      %v333 = vld [vmem:[#allocation2 + $0xc0] sm:$0xff]
      %v334 = vld [vmem:[#allocation2 + $0xc8] sm:$0xff]
      %v335 = vld [vmem:[#allocation2 + $0xd0] sm:$0xff]
      %v336 = vld [vmem:[#allocation2 + $0xd8] sm:$0xff]
      %v337 = vld [vmem:[#allocation2 + $0xe0] sm:$0xff]
      %v338 = vld [vmem:[#allocation2 + $0xe8] sm:$0xff]
      %v339 = vld [vmem:[#allocation2 + $0xf0] sm:$0xff]
      %v340 = vld [vmem:[#allocation2 + $0xf8] sm:$0xff]
      %v341 = vld [vmem:[%s244] sm:$0xff]
      %v342 = vld [vmem:[%s244 + $0x8] sm:$0xff]
      %v343 = vld [vmem:[%s244 + $0x10] sm:$0xff]
      %v344 = vld [vmem:[%s244 + $0x18] sm:$0xff]
      %v345 = vld [vmem:[%s244 + $0x20] sm:$0xff]
      %v346 = vld [vmem:[%s244 + $0x28] sm:$0xff]
      %v347 = vld [vmem:[%s244 + $0x30] sm:$0xff]
      %v348 = vld [vmem:[%s244 + $0x38] sm:$0xff]
      %v349 = vld [vmem:[%s244 + $0x40] sm:$0xff]
      %v350 = vld [vmem:[%s244 + $0x48] sm:$0xff]
      %v351 = vld [vmem:[%s244 + $0x50] sm:$0xff]
      %v352 = vld [vmem:[%s244 + $0x58] sm:$0xff]
      %v353 = vld [vmem:[%s244 + $0x60] sm:$0xff]
      %v354 = vld [vmem:[%s244 + $0x68] sm:$0xff]
      %v355 = vld [vmem:[%s244 + $0x70] sm:$0xff]
      %v356 = vld [vmem:[%s244 + $0x78] sm:$0xff]
      %v357 = vld [vmem:[%s244 + $0x80] sm:$0xff]
      %v358 = vld [vmem:[%s244 + $0x88] sm:$0xff]
      %v359 = vld [vmem:[%s244 + $0x90] sm:$0xff]
      %v360 = vld [vmem:[%s244 + $0x98] sm:$0xff]
      %v361 = vld [vmem:[%s244 + $0xa0] sm:$0xff]
      %v362 = vld [vmem:[%s244 + $0xa8] sm:$0xff]
      %v363 = vld [vmem:[%s244 + $0xb0] sm:$0xff]
      %v364 = vld [vmem:[%s244 + $0xb8] sm:$0xff]
      %v365 = vld [vmem:[%s244 + $0xc0] sm:$0xff]
      %v366 = vld [vmem:[%s244 + $0xc8] sm:$0xff]
      %v367 = vld [vmem:[%s244 + $0xd0] sm:$0xff]
      %v368 = vld [vmem:[%s244 + $0xd8] sm:$0xff]
      %v369 = vld [vmem:[%s244 + $0xe0] sm:$0xff]
      %v370 = vld [vmem:[%s244 + $0xe8] sm:$0xff]
      %v371 = vld [vmem:[%s244 + $0xf0] sm:$0xff]
      %v372 = vld [vmem:[%s244 + $0xf8] sm:$0xff]
      %v373 = vld [vmem:[%s254] sm:$0xf]
      %v374 = vld [vmem:[%s254 + $0x4] sm:$0xf]
      %v375 = vld [vmem:[%s254 + $0x8] sm:$0xf]
      %v376 = vld [vmem:[%s254 + $0xc] sm:$0xf]
      %v377 = vld [vmem:[%s254 + $0x10] sm:$0xf]
      %v378 = vld [vmem:[%s254 + $0x14] sm:$0xf]
      %v379 = vld [vmem:[%s254 + $0x18] sm:$0xf]
      %v380 = vld [vmem:[%s254 + $0x1c] sm:$0xf]
      %v381 = vld [vmem:[%s254 + $0x20] sm:$0xf]
      %v382 = vld [vmem:[%s254 + $0x24] sm:$0xf]
      %v383 = vld [vmem:[%s254 + $0x28] sm:$0xf]
      %v384 = vld [vmem:[%s254 + $0x2c] sm:$0xf]
      %v385 = vld [vmem:[%s254 + $0x30] sm:$0xf]
      %v386 = vld [vmem:[%s254 + $0x34] sm:$0xf]
      %v387 = vld [vmem:[%s254 + $0x38] sm:$0xf]
      %v388 = vld [vmem:[%s254 + $0x3c] sm:$0xf]
      %v389 = vld [vmem:[%s254 + $0x40] sm:$0xf]
      %v390 = vld [vmem:[%s254 + $0x44] sm:$0xf]
      %v391 = vld [vmem:[%s254 + $0x48] sm:$0xf]
      %v392 = vld [vmem:[%s254 + $0x4c] sm:$0xf]
      %v393 = vld [vmem:[%s254 + $0x50] sm:$0xf]
      %v394 = vld [vmem:[%s254 + $0x54] sm:$0xf]
      %v395 = vld [vmem:[%s254 + $0x58] sm:$0xf]
      %v396 = vld [vmem:[%s254 + $0x5c] sm:$0xf]
      %v397 = vld [vmem:[%s254 + $0x60] sm:$0xf]
      %v398 = vld [vmem:[%s254 + $0x64] sm:$0xf]
      %v399 = vld [vmem:[%s254 + $0x68] sm:$0xf]
      %v400 = vld [vmem:[%s254 + $0x6c] sm:$0xf]
      %v401 = vld [vmem:[%s254 + $0x70] sm:$0xf]
      %v402 = vld [vmem:[%s254 + $0x74] sm:$0xf]
      %v403 = vld [vmem:[%s254 + $0x78] sm:$0xf]
      %v404 = vld [vmem:[%s254 + $0x7c] sm:$0xf]
      %v437 = vunpack.c.l.b16 %v341
      %v438 = vunpack.c.h.b16 %v341
      %v439 = vunpack.c.l.b16 %v342
      %v440 = vunpack.c.h.b16 %v342
      %v441 = vunpack.c.l.b16 %v343
      %v442 = vunpack.c.h.b16 %v343
      %v443 = vunpack.c.l.b16 %v344
      %v444 = vunpack.c.h.b16 %v344
      %v445 = vunpack.c.l.b16 %v345
      %v446 = vunpack.c.h.b16 %v345
      %v447 = vunpack.c.l.b16 %v346
      %v448 = vunpack.c.h.b16 %v346
      %v449 = vunpack.c.l.b16 %v347
      %v450 = vunpack.c.h.b16 %v347
      %v451 = vunpack.c.l.b16 %v348
      %v452 = vunpack.c.h.b16 %v348
      %v453 = vunpack.c.l.b16 %v349
      %v454 = vunpack.c.h.b16 %v349
      %v455 = vunpack.c.l.b16 %v350
      %v456 = vunpack.c.h.b16 %v350
      %v457 = vunpack.c.l.b16 %v351
      %v458 = vunpack.c.h.b16 %v351
      %v459 = vunpack.c.l.b16 %v352
      %v460 = vunpack.c.h.b16 %v352
      %v461 = vunpack.c.l.b16 %v353
      %v462 = vunpack.c.h.b16 %v353
      %v463 = vunpack.c.l.b16 %v354
      %v464 = vunpack.c.h.b16 %v354
      %v465 = vunpack.c.l.b16 %v355
      %v466 = vunpack.c.h.b16 %v355
      %v467 = vunpack.c.l.b16 %v356
      %v468 = vunpack.c.h.b16 %v356
      %v469 = vunpack.c.l.b16 %v357
      %v470 = vunpack.c.h.b16 %v357
      %v471 = vunpack.c.l.b16 %v358
      %v472 = vunpack.c.h.b16 %v358
      %v473 = vunpack.c.l.b16 %v359
      %v474 = vunpack.c.h.b16 %v359
      %v475 = vunpack.c.l.b16 %v360
      %v476 = vunpack.c.h.b16 %v360
      %v477 = vunpack.c.l.b16 %v361
      %v478 = vunpack.c.h.b16 %v361
      %v479 = vunpack.c.l.b16 %v362
      %v480 = vunpack.c.h.b16 %v362
      %v481 = vunpack.c.l.b16 %v363
      %v482 = vunpack.c.h.b16 %v363
      %v483 = vunpack.c.l.b16 %v364
      %v484 = vunpack.c.h.b16 %v364
      %v485 = vunpack.c.l.b16 %v365
      %v486 = vunpack.c.h.b16 %v365
      %v487 = vunpack.c.l.b16 %v366
      %v488 = vunpack.c.h.b16 %v366
      %v489 = vunpack.c.l.b16 %v367
      %v490 = vunpack.c.h.b16 %v367
      %v491 = vunpack.c.l.b16 %v368
      %v492 = vunpack.c.h.b16 %v368
      %v493 = vunpack.c.l.b16 %v369
      %v494 = vunpack.c.h.b16 %v369
      %v495 = vunpack.c.l.b16 %v370
      %v496 = vunpack.c.h.b16 %v370
      %v497 = vunpack.c.l.b16 %v371
      %v498 = vunpack.c.h.b16 %v371
      %v499 = vunpack.c.l.b16 %v372
      %v500 = vunpack.c.h.b16 %v372
      %v501 = vpack.c.b16 %v439, %v437
      %v502 = vpack.c.b16 %v440, %v438
      %v503 = vpack.c.b16 %v443, %v441
      %v504 = vpack.c.b16 %v444, %v442
      %v505 = vpack.c.b16 %v447, %v445
      %v506 = vpack.c.b16 %v448, %v446
      %v507 = vpack.c.b16 %v451, %v449
      %v508 = vpack.c.b16 %v452, %v450
      %v509 = vpack.c.b16 %v455, %v453
      %v510 = vpack.c.b16 %v456, %v454
      %v511 = vpack.c.b16 %v459, %v457
      %v512 = vpack.c.b16 %v460, %v458
      %v513 = vpack.c.b16 %v463, %v461
      %v514 = vpack.c.b16 %v464, %v462
      %v515 = vpack.c.b16 %v467, %v465
      %v516 = vpack.c.b16 %v468, %v466
      %v517 = vpack.c.b16 %v471, %v469
      %v518 = vpack.c.b16 %v472, %v470
      %v519 = vpack.c.b16 %v475, %v473
      %v520 = vpack.c.b16 %v476, %v474
      %v521 = vpack.c.b16 %v479, %v477
      %v522 = vpack.c.b16 %v480, %v478
      %v523 = vpack.c.b16 %v483, %v481
      %v524 = vpack.c.b16 %v484, %v482
      %v525 = vpack.c.b16 %v487, %v485
      %v526 = vpack.c.b16 %v488, %v486
      %v527 = vpack.c.b16 %v491, %v489
      %v528 = vpack.c.b16 %v492, %v490
      %v529 = vpack.c.b16 %v495, %v493
      %v530 = vpack.c.b16 %v496, %v494
      %v531 = vpack.c.b16 %v499, %v497
      %v532 = vpack.c.b16 %v500, %v498
      %v597 = vunpack.c.l.b16 %v373
      %v598 = vunpack.c.l.b16 %v374
      %v599 = vunpack.c.l.b16 %v375
      %v600 = vunpack.c.l.b16 %v376
      %v601 = vunpack.c.l.b16 %v377
      %v602 = vunpack.c.l.b16 %v378
      %v603 = vunpack.c.l.b16 %v379
      %v604 = vunpack.c.l.b16 %v380
      %v605 = vunpack.c.l.b16 %v381
      %v606 = vunpack.c.l.b16 %v382
      %v607 = vunpack.c.l.b16 %v383
      %v608 = vunpack.c.l.b16 %v384
      %v609 = vunpack.c.l.b16 %v385
      %v610 = vunpack.c.l.b16 %v386
      %v611 = vunpack.c.l.b16 %v387
      %v612 = vunpack.c.l.b16 %v388
      %v613 = vunpack.c.l.b16 %v389
      %v614 = vunpack.c.l.b16 %v390
      %v615 = vunpack.c.l.b16 %v391
      %v616 = vunpack.c.l.b16 %v392
      %v617 = vunpack.c.l.b16 %v393
      %v618 = vunpack.c.l.b16 %v394
      %v619 = vunpack.c.l.b16 %v395
      %v620 = vunpack.c.l.b16 %v396
      %v621 = vunpack.c.l.b16 %v397
      %v622 = vunpack.c.l.b16 %v398
      %v623 = vunpack.c.l.b16 %v399
      %v624 = vunpack.c.l.b16 %v400
      %v625 = vunpack.c.l.b16 %v401
      %v626 = vunpack.c.l.b16 %v402
      %v627 = vunpack.c.l.b16 %v403
      %v628 = vunpack.c.l.b16 %v404
      %v629 = vpack.c.b16 %v598, %v597
      %v630 = vpack.c.b16 %v600, %v599
      %v631 = vpack.c.b16 %v602, %v601
      %v632 = vpack.c.b16 %v604, %v603
      %v633 = vpack.c.b16 %v606, %v605
      %v634 = vpack.c.b16 %v608, %v607
      %v635 = vpack.c.b16 %v610, %v609
      %v636 = vpack.c.b16 %v612, %v611
      %v637 = vpack.c.b16 %v614, %v613
      %v638 = vpack.c.b16 %v616, %v615
      %v639 = vpack.c.b16 %v618, %v617
      %v640 = vpack.c.b16 %v620, %v619
      %v641 = vpack.c.b16 %v622, %v621
      %v642 = vpack.c.b16 %v624, %v623
      %v643 = vpack.c.b16 %v626, %v625
      %v644 = vpack.c.b16 %v628, %v627
      %661 = vmatprep.subr.bf16.mxu0 0
      %662 = vmatpush1.bf16.msra.mxu0 %v636
      %663 = vmatprep.subr.bf16.mxu0 0
      %664 = vmatpush1.bf16.msra.mxu0 %v635
      %665 = vmatprep.subr.bf16.mxu0 0
      %666 = vmatpush1.bf16.msra.mxu0 %v634
      %667 = vmatprep.subr.bf16.mxu0 0
      %668 = vmatpush1.bf16.msra.mxu0 %v633
      %669 = vmatprep.subr.bf16.mxu0 0
      %670 = vmatpush1.bf16.msra.mxu0 %v632
      %671 = vmatprep.subr.bf16.mxu0 0
      %672 = vmatpush1.bf16.msra.mxu0 %v631
      %673 = vmatprep.subr.bf16.mxu0 0
      %674 = vmatpush1.bf16.msra.mxu0 %v630
      %675 = vmatprep.subr.bf16.mxu0 0
      %676 = vmatpush1.bf16.msra.mxu0 %v629
      %677 = vmatprep.subr.bf16.mxu0 0
      %678 = vmatpush2.bf16.msra.mxu0 %v644
      %679 = vmatprep.subr.bf16.mxu0 0
      %680 = vmatpush2.bf16.msra.mxu0 %v643
      %681 = vmatprep.subr.bf16.mxu0 0
      %682 = vmatpush2.bf16.msra.mxu0 %v642
      %683 = vmatprep.subr.bf16.mxu0 0
      %684 = vmatpush2.bf16.msra.mxu0 %v641
      %685 = vmatprep.subr.bf16.mxu0 0
      %686 = vmatpush2.bf16.msra.mxu0 %v640
      %687 = vmatprep.subr.bf16.mxu0 0
      %688 = vmatpush2.bf16.msra.mxu0 %v639
      %689 = vmatprep.subr.bf16.mxu0 0
      %690 = vmatpush2.bf16.msra.mxu0 %v638
      %691 = vmatprep.subr.bf16.mxu0 0
      %692 = vmatpush2.bf16.msra.mxu0 %v637
      %693 = vmatprep.mubr.bf16.mxu0 %v502
      %694 = vmatmul.mubr.bf16.gmra.mxu0 %v501
      %v695 = vpop.f32.mrf.mxu0
      %v696 = vadd.f32 0.0, %v695
      %v697 = vpop.f32.mrf.mxu0
      %v698 = vpop.f32.mrf.mxu0
      %v699 = vadd.f32 0.0, %v698
      %v700 = vpop.f32.mrf.mxu0
      %701 = vmatprep.mubr.bf16.mxu0 %v504
      %702 = vmatmul.mubr.bf16.gmra.mxu0 %v503
      %v703 = vpop.f32.mrf.mxu0
      %v704 = vadd.f32 0.0, %v703
      %v705 = vpop.f32.mrf.mxu0
      %v706 = vpop.f32.mrf.mxu0
      %v707 = vadd.f32 0.0, %v706
      %v708 = vpop.f32.mrf.mxu0
      %709 = vmatprep.mubr.bf16.mxu0 %v506
      %710 = vmatmul.mubr.bf16.gmra.mxu0 %v505
      %v711 = vpop.f32.mrf.mxu0
      %v712 = vadd.f32 0.0, %v711
      %v713 = vpop.f32.mrf.mxu0
      %v714 = vpop.f32.mrf.mxu0
      %v715 = vadd.f32 0.0, %v714
      %v716 = vpop.f32.mrf.mxu0
      %717 = vmatprep.mubr.bf16.mxu0 %v508
      %718 = vmatmul.mubr.bf16.gmra.mxu0 %v507
      %v719 = vpop.f32.mrf.mxu0
      %v720 = vadd.f32 0.0, %v719
      %v721 = vpop.f32.mrf.mxu0
      %v722 = vpop.f32.mrf.mxu0
      %v723 = vadd.f32 0.0, %v722
      %v724 = vpop.f32.mrf.mxu0
      %725 = vmatprep.mubr.bf16.mxu0 %v510
      %726 = vmatmul.mubr.bf16.gmra.mxu0 %v509
      %v727 = vpop.f32.mrf.mxu0
      %v728 = vadd.f32 0.0, %v727
      %v729 = vpop.f32.mrf.mxu0
      %v730 = vpop.f32.mrf.mxu0
      %v731 = vadd.f32 0.0, %v730
      %v732 = vpop.f32.mrf.mxu0
      %733 = vmatprep.mubr.bf16.mxu0 %v512
      %734 = vmatmul.mubr.bf16.gmra.mxu0 %v511
      %v735 = vpop.f32.mrf.mxu0
      %v736 = vadd.f32 0.0, %v735
      %v737 = vpop.f32.mrf.mxu0
      %v738 = vpop.f32.mrf.mxu0
      %v739 = vadd.f32 0.0, %v738
      %v740 = vpop.f32.mrf.mxu0
      %741 = vmatprep.mubr.bf16.mxu0 %v514
      %742 = vmatmul.mubr.bf16.gmra.mxu0 %v513
      %v743 = vpop.f32.mrf.mxu0
      %v744 = vadd.f32 0.0, %v743
      %v745 = vpop.f32.mrf.mxu0
      %v746 = vpop.f32.mrf.mxu0
      %v747 = vadd.f32 0.0, %v746
      %v748 = vpop.f32.mrf.mxu0
      %749 = vmatprep.mubr.bf16.mxu0 %v516
      %750 = vmatmul.mubr.bf16.gmra.mxu0 %v515
      %v751 = vpop.f32.mrf.mxu0
      %v752 = vadd.f32 0.0, %v751
      %v753 = vpop.f32.mrf.mxu0
      %v754 = vpop.f32.mrf.mxu0
      %v755 = vadd.f32 0.0, %v754
      %v756 = vpop.f32.mrf.mxu0
      %757 = vmatprep.mubr.bf16.mxu0 %v518
      %758 = vmatmul.mubr.bf16.gmra.mxu0 %v517
      %v759 = vpop.f32.mrf.mxu0
      %v760 = vadd.f32 0.0, %v759
      %v761 = vpop.f32.mrf.mxu0
      %v762 = vpop.f32.mrf.mxu0
      %v763 = vadd.f32 0.0, %v762
      %v764 = vpop.f32.mrf.mxu0
      %765 = vmatprep.mubr.bf16.mxu0 %v520
      %766 = vmatmul.mubr.bf16.gmra.mxu0 %v519
      %v767 = vpop.f32.mrf.mxu0
      %v768 = vadd.f32 0.0, %v767
      %v769 = vpop.f32.mrf.mxu0
      %v770 = vpop.f32.mrf.mxu0
      %v771 = vadd.f32 0.0, %v770
      %v772 = vpop.f32.mrf.mxu0
      %773 = vmatprep.mubr.bf16.mxu0 %v522
      %774 = vmatmul.mubr.bf16.gmra.mxu0 %v521
      %v775 = vpop.f32.mrf.mxu0
      %v776 = vadd.f32 0.0, %v775
      %v777 = vpop.f32.mrf.mxu0
      %v778 = vpop.f32.mrf.mxu0
      %v779 = vadd.f32 0.0, %v778
      %v780 = vpop.f32.mrf.mxu0
      %781 = vmatprep.mubr.bf16.mxu0 %v524
      %782 = vmatmul.mubr.bf16.gmra.mxu0 %v523
      %v783 = vpop.f32.mrf.mxu0
      %v784 = vadd.f32 0.0, %v783
      %v785 = vpop.f32.mrf.mxu0
      %v786 = vpop.f32.mrf.mxu0
      %v787 = vadd.f32 0.0, %v786
      %v788 = vpop.f32.mrf.mxu0
      %789 = vmatprep.mubr.bf16.mxu0 %v526
      %790 = vmatmul.mubr.bf16.gmra.mxu0 %v525
      %v791 = vpop.f32.mrf.mxu0
      %v792 = vadd.f32 0.0, %v791
      %v793 = vpop.f32.mrf.mxu0
      %v794 = vpop.f32.mrf.mxu0
      %v795 = vadd.f32 0.0, %v794
      %v796 = vpop.f32.mrf.mxu0
      %797 = vmatprep.mubr.bf16.mxu0 %v528
      %798 = vmatmul.mubr.bf16.gmra.mxu0 %v527
      %v799 = vpop.f32.mrf.mxu0
      %v800 = vadd.f32 0.0, %v799
      %v801 = vpop.f32.mrf.mxu0
      %v802 = vpop.f32.mrf.mxu0
      %v803 = vadd.f32 0.0, %v802
      %v804 = vpop.f32.mrf.mxu0
      %805 = vmatprep.mubr.bf16.mxu0 %v530
      %806 = vmatmul.mubr.bf16.gmra.mxu0 %v529
      %v807 = vpop.f32.mrf.mxu0
      %v808 = vadd.f32 0.0, %v807
      %v809 = vpop.f32.mrf.mxu0
      %v810 = vpop.f32.mrf.mxu0
      %v811 = vadd.f32 0.0, %v810
      %v812 = vpop.f32.mrf.mxu0
      %813 = vmatprep.mubr.bf16.mxu0 %v532
      %814 = vmatmul.mubr.bf16.gmra.mxu0 %v531
      %v815 = vpop.f32.mrf.mxu0
      %v816 = vadd.f32 0.0, %v815
      %v817 = vpop.f32.mrf.mxu0
      %v818 = vpop.f32.mrf.mxu0
      %v819 = vadd.f32 0.0, %v818
      %v820 = vpop.f32.mrf.mxu0
      %821 = vdwg.mxu0
      %v822 = vadd.f32 %v309, %v696
      %v823 = vadd.f32 %v310, %v699
      %v824 = vadd.f32 %v311, %v704
      %v825 = vadd.f32 %v312, %v707
      %v826 = vadd.f32 %v313, %v712
      %v827 = vadd.f32 %v314, %v715
      %v828 = vadd.f32 %v315, %v720
      %v829 = vadd.f32 %v316, %v723
      %v830 = vadd.f32 %v317, %v728
      %v831 = vadd.f32 %v318, %v731
      %v832 = vadd.f32 %v319, %v736
      %v833 = vadd.f32 %v320, %v739
      %v834 = vadd.f32 %v321, %v744
      %v835 = vadd.f32 %v322, %v747
      %v836 = vadd.f32 %v323, %v752
      %v837 = vadd.f32 %v324, %v755
      %v838 = vadd.f32 %v325, %v760
      %v839 = vadd.f32 %v326, %v763
      %v840 = vadd.f32 %v327, %v768
      %v841 = vadd.f32 %v328, %v771
      %v842 = vadd.f32 %v329, %v776
      %v843 = vadd.f32 %v330, %v779
      %v844 = vadd.f32 %v331, %v784
      %v845 = vadd.f32 %v332, %v787
      %v846 = vadd.f32 %v333, %v792
      %v847 = vadd.f32 %v334, %v795
      %v848 = vadd.f32 %v335, %v800
      %v849 = vadd.f32 %v336, %v803
      %v850 = vadd.f32 %v337, %v808
      %v851 = vadd.f32 %v338, %v811
      %v852 = vadd.f32 %v339, %v816
      %v853 = vadd.f32 %v340, %v819
      %854 = vst [vmem:[#allocation2] sm:$0xff] %v822
      %855 = vst [vmem:[#allocation2 + $0x8] sm:$0xff] %v823
      %856 = vst [vmem:[#allocation2 + $0x10] sm:$0xff] %v824
      %857 = vst [vmem:[#allocation2 + $0x18] sm:$0xff] %v825
      %858 = vst [vmem:[#allocation2 + $0x20] sm:$0xff] %v826
      %859 = vst [vmem:[#allocation2 + $0x28] sm:$0xff] %v827
      %860 = vst [vmem:[#allocation2 + $0x30] sm:$0xff] %v828
      %861 = vst [vmem:[#allocation2 + $0x38] sm:$0xff] %v829
      %862 = vst [vmem:[#allocation2 + $0x40] sm:$0xff] %v830
      %863 = vst [vmem:[#allocation2 + $0x48] sm:$0xff] %v831
      %864 = vst [vmem:[#allocation2 + $0x50] sm:$0xff] %v832
      %865 = vst [vmem:[#allocation2 + $0x58] sm:$0xff] %v833
      %866 = vst [vmem:[#allocation2 + $0x60] sm:$0xff] %v834
      %867 = vst [vmem:[#allocation2 + $0x68] sm:$0xff] %v835
      %868 = vst [vmem:[#allocation2 + $0x70] sm:$0xff] %v836
      %869 = vst [vmem:[#allocation2 + $0x78] sm:$0xff] %v837
      %870 = vst [vmem:[#allocation2 + $0x80] sm:$0xff] %v838
      %871 = vst [vmem:[#allocation2 + $0x88] sm:$0xff] %v839
      %872 = vst [vmem:[#allocation2 + $0x90] sm:$0xff] %v840
      %873 = vst [vmem:[#allocation2 + $0x98] sm:$0xff] %v841
      %874 = vst [vmem:[#allocation2 + $0xa0] sm:$0xff] %v842
      %875 = vst [vmem:[#allocation2 + $0xa8] sm:$0xff] %v843
      %876 = vst [vmem:[#allocation2 + $0xb0] sm:$0xff] %v844
      %877 = vst [vmem:[#allocation2 + $0xb8] sm:$0xff] %v845
      %878 = vst [vmem:[#allocation2 + $0xc0] sm:$0xff] %v846
      %879 = vst [vmem:[#allocation2 + $0xc8] sm:$0xff] %v847
      %880 = vst [vmem:[#allocation2 + $0xd0] sm:$0xff] %v848
      %881 = vst [vmem:[#allocation2 + $0xd8] sm:$0xff] %v849
      %882 = vst [vmem:[#allocation2 + $0xe0] sm:$0xff] %v850
      %883 = vst [vmem:[#allocation2 + $0xe8] sm:$0xff] %v851
      %884 = vst [vmem:[#allocation2 + $0xf0] sm:$0xff] %v852
      %885 = vst [vmem:[#allocation2 + $0xf8] sm:$0xff] %v853
      // Predicated region
      $region33: #{matmul_bn_stats.1} parent=27 // pred_check
        %p886 = pneg %p273
      $region34: #{matmul_bn_stats.1} parent=27 // pred_check_branch
        %888 = sbr.rel (%p886) target = $region36
      $region35: #{matmul_bn_stats.1} parent=27 // pred_region
        %v889 = vld [vmem:[#allocation2] sm:$0xff]
        %v890 = vld [vmem:[#allocation2 + $0x8] sm:$0xff]
        %v891 = vld [vmem:[#allocation2 + $0x10] sm:$0xff]
        %v892 = vld [vmem:[#allocation2 + $0x18] sm:$0xff]
        %v893 = vld [vmem:[#allocation2 + $0x20] sm:$0xff]
        %v894 = vld [vmem:[#allocation2 + $0x28] sm:$0xff]
        %v895 = vld [vmem:[#allocation2 + $0x30] sm:$0xff]
        %v896 = vld [vmem:[#allocation2 + $0x38] sm:$0xff]
        %v897 = vld [vmem:[#allocation2 + $0x40] sm:$0xff]
        %v898 = vld [vmem:[#allocation2 + $0x48] sm:$0xff]
        %v899 = vld [vmem:[#allocation2 + $0x50] sm:$0xff]
        %v900 = vld [vmem:[#allocation2 + $0x58] sm:$0xff]
        %v901 = vld [vmem:[#allocation2 + $0x60] sm:$0xff]
        %v902 = vld [vmem:[#allocation2 + $0x68] sm:$0xff]
        %v903 = vld [vmem:[#allocation2 + $0x70] sm:$0xff]
        %v904 = vld [vmem:[#allocation2 + $0x78] sm:$0xff]
        %v905 = vld [vmem:[#allocation2 + $0x80] sm:$0xff]
        %v906 = vld [vmem:[#allocation2 + $0x88] sm:$0xff]
        %v907 = vld [vmem:[#allocation2 + $0x90] sm:$0xff]
        %v908 = vld [vmem:[#allocation2 + $0x98] sm:$0xff]
        %v909 = vld [vmem:[#allocation2 + $0xa0] sm:$0xff]
        %v910 = vld [vmem:[#allocation2 + $0xa8] sm:$0xff]
        %v911 = vld [vmem:[#allocation2 + $0xb0] sm:$0xff]
        %v912 = vld [vmem:[#allocation2 + $0xb8] sm:$0xff]
        %v913 = vld [vmem:[#allocation2 + $0xc0] sm:$0xff]
        %v914 = vld [vmem:[#allocation2 + $0xc8] sm:$0xff]
        %v915 = vld [vmem:[#allocation2 + $0xd0] sm:$0xff]
        %v916 = vld [vmem:[#allocation2 + $0xd8] sm:$0xff]
        %v917 = vld [vmem:[#allocation2 + $0xe0] sm:$0xff]
        %v918 = vld [vmem:[#allocation2 + $0xe8] sm:$0xff]
        %v919 = vld [vmem:[#allocation2 + $0xf0] sm:$0xff]
        %v920 = vld [vmem:[#allocation2 + $0xf8] sm:$0xff]
        %v921 = vpack.c.bf16 %v890, %v889
        %v922 = vpack.c.bf16 %v892, %v891
        %v923 = vpack.c.bf16 %v894, %v893
        %v924 = vpack.c.bf16 %v896, %v895
        %v925 = vpack.c.bf16 %v898, %v897
        %v926 = vpack.c.bf16 %v900, %v899
        %v927 = vpack.c.bf16 %v902, %v901
        %v928 = vpack.c.bf16 %v904, %v903
        %v929 = vpack.c.bf16 %v906, %v905
        %v930 = vpack.c.bf16 %v908, %v907
        %v931 = vpack.c.bf16 %v910, %v909
        %v932 = vpack.c.bf16 %v912, %v911
        %v933 = vpack.c.bf16 %v914, %v913
        %v934 = vpack.c.bf16 %v916, %v915
        %v935 = vpack.c.bf16 %v918, %v917
        %v936 = vpack.c.bf16 %v920, %v919
        %v953 = vunpack.c.l.b16 %v921
        %v954 = vunpack.c.h.b16 %v921
        %v955 = vunpack.c.l.b16 %v922
        %v956 = vunpack.c.h.b16 %v922
        %v957 = vunpack.c.l.b16 %v923
        %v958 = vunpack.c.h.b16 %v923
        %v959 = vunpack.c.l.b16 %v924
        %v960 = vunpack.c.h.b16 %v924
        %v961 = vunpack.c.l.b16 %v925
        %v962 = vunpack.c.h.b16 %v925
        %v963 = vunpack.c.l.b16 %v926
        %v964 = vunpack.c.h.b16 %v926
        %v965 = vunpack.c.l.b16 %v927
        %v966 = vunpack.c.h.b16 %v927
        %v967 = vunpack.c.l.b16 %v928
        %v968 = vunpack.c.h.b16 %v928
        %v969 = vunpack.c.l.b16 %v929
        %v970 = vunpack.c.h.b16 %v929
        %v971 = vunpack.c.l.b16 %v930
        %v972 = vunpack.c.h.b16 %v930
        %v973 = vunpack.c.l.b16 %v931
        %v974 = vunpack.c.h.b16 %v931
        %v975 = vunpack.c.l.b16 %v932
        %v976 = vunpack.c.h.b16 %v932
        %v977 = vunpack.c.l.b16 %v933
        %v978 = vunpack.c.h.b16 %v933
        %v979 = vunpack.c.l.b16 %v934
        %v980 = vunpack.c.h.b16 %v934
        %v981 = vunpack.c.l.b16 %v935
        %v982 = vunpack.c.h.b16 %v935
        %v983 = vunpack.c.l.b16 %v936
        %v984 = vunpack.c.h.b16 %v936
        %v985 = vpack.c.b16 %v953, %v953
        %v986 = vpack.c.b16 %v954, %v954
        %v987 = vpack.c.b16 %v955, %v955
        %v988 = vpack.c.b16 %v956, %v956
        %v989 = vpack.c.b16 %v957, %v957
        %v990 = vpack.c.b16 %v958, %v958
        %v991 = vpack.c.b16 %v959, %v959
        %v992 = vpack.c.b16 %v960, %v960
        %v993 = vpack.c.b16 %v961, %v961
        %v994 = vpack.c.b16 %v962, %v962
        %v995 = vpack.c.b16 %v963, %v963
        %v996 = vpack.c.b16 %v964, %v964
        %v997 = vpack.c.b16 %v965, %v965
        %v998 = vpack.c.b16 %v966, %v966
        %v999 = vpack.c.b16 %v967, %v967
        %v1000 = vpack.c.b16 %v968, %v968
        %v1001 = vpack.c.b16 %v969, %v969
        %v1002 = vpack.c.b16 %v970, %v970
        %v1003 = vpack.c.b16 %v971, %v971
        %v1004 = vpack.c.b16 %v972, %v972
        %v1005 = vpack.c.b16 %v973, %v973
        %v1006 = vpack.c.b16 %v974, %v974
        %v1007 = vpack.c.b16 %v975, %v975
        %v1008 = vpack.c.b16 %v976, %v976
        %v1009 = vpack.c.b16 %v977, %v977
        %v1010 = vpack.c.b16 %v978, %v978
        %v1011 = vpack.c.b16 %v979, %v979
        %v1012 = vpack.c.b16 %v980, %v980
        %v1013 = vpack.c.b16 %v981, %v981
        %v1014 = vpack.c.b16 %v982, %v982
        %v1015 = vpack.c.b16 %v983, %v983
        %v1016 = vpack.c.b16 %v984, %v984
        %1049 = vst [vmem:[%s263] sm:$0xf] %v985
        %1050 = vst [vmem:[%s263 + $0x4] sm:$0xf] %v986
        %1051 = vst [vmem:[%s263 + $0x8] sm:$0xf] %v987
        %1052 = vst [vmem:[%s263 + $0xc] sm:$0xf] %v988
        %1053 = vst [vmem:[%s263 + $0x10] sm:$0xf] %v989
        %1054 = vst [vmem:[%s263 + $0x14] sm:$0xf] %v990
        %1055 = vst [vmem:[%s263 + $0x18] sm:$0xf] %v991
        %1056 = vst [vmem:[%s263 + $0x1c] sm:$0xf] %v992
        %1057 = vst [vmem:[%s263 + $0x20] sm:$0xf] %v993
        %1058 = vst [vmem:[%s263 + $0x24] sm:$0xf] %v994
        %1059 = vst [vmem:[%s263 + $0x28] sm:$0xf] %v995
        %1060 = vst [vmem:[%s263 + $0x2c] sm:$0xf] %v996
        %1061 = vst [vmem:[%s263 + $0x30] sm:$0xf] %v997
        %1062 = vst [vmem:[%s263 + $0x34] sm:$0xf] %v998
        %1063 = vst [vmem:[%s263 + $0x38] sm:$0xf] %v999
        %1064 = vst [vmem:[%s263 + $0x3c] sm:$0xf] %v1000
        %1065 = vst [vmem:[%s263 + $0x40] sm:$0xf] %v1001
        %1066 = vst [vmem:[%s263 + $0x44] sm:$0xf] %v1002
        %1067 = vst [vmem:[%s263 + $0x48] sm:$0xf] %v1003
        %1068 = vst [vmem:[%s263 + $0x4c] sm:$0xf] %v1004
        %1069 = vst [vmem:[%s263 + $0x50] sm:$0xf] %v1005
        %1070 = vst [vmem:[%s263 + $0x54] sm:$0xf] %v1006
        %1071 = vst [vmem:[%s263 + $0x58] sm:$0xf] %v1007
        %1072 = vst [vmem:[%s263 + $0x5c] sm:$0xf] %v1008
        %1073 = vst [vmem:[%s263 + $0x60] sm:$0xf] %v1009
        %1074 = vst [vmem:[%s263 + $0x64] sm:$0xf] %v1010
        %1075 = vst [vmem:[%s263 + $0x68] sm:$0xf] %v1011
        %1076 = vst [vmem:[%s263 + $0x6c] sm:$0xf] %v1012
        %1077 = vst [vmem:[%s263 + $0x70] sm:$0xf] %v1013
        %1078 = vst [vmem:[%s263 + $0x74] sm:$0xf] %v1014
        %1079 = vst [vmem:[%s263 + $0x78] sm:$0xf] %v1015
        %1080 = vst [vmem:[%s263 + $0x7c] sm:$0xf] %v1016
        %v1081 = vadd.f32 %v889, %v890
        %v1082 = vadd.f32 %v1081, %v891
        %v1083 = vadd.f32 %v1082, %v892
        %v1084 = vadd.f32 %v1083, %v893
        %v1085 = vadd.f32 %v1084, %v894
        %v1086 = vadd.f32 %v1085, %v895
        %v1087 = vadd.f32 %v1086, %v896
        %v1088 = vadd.f32 %v1087, %v897
        %v1089 = vadd.f32 %v1088, %v898
        %v1090 = vadd.f32 %v1089, %v899
        %v1091 = vadd.f32 %v1090, %v900
        %v1092 = vadd.f32 %v1091, %v901
        %v1093 = vadd.f32 %v1092, %v902
        %v1094 = vadd.f32 %v1093, %v903
        %v1095 = vadd.f32 %v1094, %v904
        %v1096 = vadd.f32 %v1095, %v905
        %v1097 = vadd.f32 %v1096, %v906
        %v1098 = vadd.f32 %v1097, %v907
        %v1099 = vadd.f32 %v1098, %v908
        %v1100 = vadd.f32 %v1099, %v909
        %v1101 = vadd.f32 %v1100, %v910
        %v1102 = vadd.f32 %v1101, %v911
        %v1103 = vadd.f32 %v1102, %v912
        %v1104 = vadd.f32 %v1103, %v913
        %v1105 = vadd.f32 %v1104, %v914
        %v1106 = vadd.f32 %v1105, %v915
        %v1107 = vadd.f32 %v1106, %v916
        %v1108 = vadd.f32 %v1107, %v917
        %v1109 = vadd.f32 %v1108, %v918
        %v1110 = vadd.f32 %v1109, %v919
        %v1111 = vadd.f32 %v1110, %v920
        %v1112 = vrot.slane %v1111, 4
        %v1113 = vadd.f32 %v1111, %v1112
        %v1114 = vrot.slane %v1113, 2
        %v1115 = vadd.f32 %v1113, %v1114
        %v1116 = vrot.slane %v1115, 1
        %v1117 = vadd.f32 %v1115, %v1116
        %v1118 = vmul.f32 %v889, %v889
        %v1119 = vmul.f32 %v890, %v890
        %v1120 = vmul.f32 %v891, %v891
        %v1121 = vmul.f32 %v892, %v892
        %v1122 = vmul.f32 %v893, %v893
        %v1123 = vmul.f32 %v894, %v894
        %v1124 = vmul.f32 %v895, %v895
        %v1125 = vmul.f32 %v896, %v896
        %v1126 = vmul.f32 %v897, %v897
        %v1127 = vmul.f32 %v898, %v898
        %v1128 = vmul.f32 %v899, %v899
        %v1129 = vmul.f32 %v900, %v900
        %v1130 = vmul.f32 %v901, %v901
        %v1131 = vmul.f32 %v902, %v902
        %v1132 = vmul.f32 %v903, %v903
        %v1133 = vmul.f32 %v904, %v904
        %v1134 = vmul.f32 %v905, %v905
        %v1135 = vmul.f32 %v906, %v906
        %v1136 = vmul.f32 %v907, %v907
        %v1137 = vmul.f32 %v908, %v908
        %v1138 = vmul.f32 %v909, %v909
        %v1139 = vmul.f32 %v910, %v910
        %v1140 = vmul.f32 %v911, %v911
        %v1141 = vmul.f32 %v912, %v912
        %v1142 = vmul.f32 %v913, %v913
        %v1143 = vmul.f32 %v914, %v914
        %v1144 = vmul.f32 %v915, %v915
        %v1145 = vmul.f32 %v916, %v916
        %v1146 = vmul.f32 %v917, %v917
        %v1147 = vmul.f32 %v918, %v918
        %v1148 = vmul.f32 %v919, %v919
        %v1149 = vmul.f32 %v920, %v920
        %v1150 = vadd.f32 %v1118, %v1119
        %v1151 = vadd.f32 %v1150, %v1120
        %v1152 = vadd.f32 %v1151, %v1121
        %v1153 = vadd.f32 %v1152, %v1122
        %v1154 = vadd.f32 %v1153, %v1123
        %v1155 = vadd.f32 %v1154, %v1124
        %v1156 = vadd.f32 %v1155, %v1125
        %v1157 = vadd.f32 %v1156, %v1126
        %v1158 = vadd.f32 %v1157, %v1127
        %v1159 = vadd.f32 %v1158, %v1128
        %v1160 = vadd.f32 %v1159, %v1129
        %v1161 = vadd.f32 %v1160, %v1130
        %v1162 = vadd.f32 %v1161, %v1131
        %v1163 = vadd.f32 %v1162, %v1132
        %v1164 = vadd.f32 %v1163, %v1133
        %v1165 = vadd.f32 %v1164, %v1134
        %v1166 = vadd.f32 %v1165, %v1135
        %v1167 = vadd.f32 %v1166, %v1136
        %v1168 = vadd.f32 %v1167, %v1137
        %v1169 = vadd.f32 %v1168, %v1138
        %v1170 = vadd.f32 %v1169, %v1139
        %v1171 = vadd.f32 %v1170, %v1140
        %v1172 = vadd.f32 %v1171, %v1141
        %v1173 = vadd.f32 %v1172, %v1142
        %v1174 = vadd.f32 %v1173, %v1143
        %v1175 = vadd.f32 %v1174, %v1144
        %v1176 = vadd.f32 %v1175, %v1145
        %v1177 = vadd.f32 %v1176, %v1146
        %v1178 = vadd.f32 %v1177, %v1147
        %v1179 = vadd.f32 %v1178, %v1148
        %v1180 = vadd.f32 %v1179, %v1149
        %v1181 = vrot.slane %v1180, 4
        %v1182 = vadd.f32 %v1180, %v1181
        %v1183 = vrot.slane %v1182, 2
        %v1184 = vadd.f32 %v1182, %v1183
        %v1185 = vrot.slane %v1184, 1
        %v1186 = vadd.f32 %v1184, %v1185
        %v1187 = vlaneseq
        %v1188 = vshrl.u32 %v1187, 7
        %vm1189 = vcmp.eq.s32.totalorder %v1188, 0
        %vm1190 = vcmp.eq.s32.totalorder %v1188, 1
        %v1191 = vsel %vm1190, %v1186, 0.0
        %v1192 = vsel %vm1189, %v1117, %v1191
        %1193 = vst [vmem:[%s271] sm:$0xff] %v1192
      $region36: #{matmul_bn_stats.1} parent=27 // pred_fallthru
        _
      %s1194 = smul.u32 32, %s20
      %p1195 = scmp.lt.s32.totalorder %s1194, 255
      %s1196 = scalar_select %p1195, %s1194, 255
      %p1197 = scmp.lt.s32.totalorder %s21, 0
      %s1198 = scalar_select %p1197, %s21, 0
      %s1199 = sadd.s32 %s1198, %s1196
      %s1200 = smul.addr %s1199, 4
      %s1201 = scalar_lea.vmem %s2, %s1200
      %p1202 = scmp.lt.s32.totalorder %s20, 7
      %s1203 = scalar_select %p1202, %s20, 7
      %p1204 = scmp.lt.s32.totalorder %s21, 0
      %s1205 = scalar_select %p1204, %s21, 0
      %s1206 = sadd.s32 %s1205, %s1203
      %s1207 = smul.addr %s1206, 8
      %s1208 = scalar_lea.vmem %s3, %s1207
      // Predicated region
      $region37: #{matmul_bn_stats.1} parent=27 // pred_check
        %p1209 = pneg %p110
      $region38: #{matmul_bn_stats.1} parent=27 // pred_check_branch
        %1211 = sbr.rel (%p1209) target = $region40
      $region39: #{matmul_bn_stats.1} parent=27 // pred_region
        %s1212 = smul.u32 32, %s20
      $region40: #{matmul_bn_stats.1} parent=27 // pred_fallthru
        _
      // Predicated region
      $region41: #{matmul_bn_stats.1} parent=27 // pred_check
        %p1213 = pneg %p138
      $region42: #{matmul_bn_stats.1} parent=27 // pred_check_branch
        %1215 = sbr.rel (%p1213) target = $region44
      $region43: #{matmul_bn_stats.1} parent=27 // pred_region
        _
      $region44: #{matmul_bn_stats.1} parent=27 // pred_fallthru
        _
    $region28: #{matmul_bn_stats.1} parent=5 // pred_fallthru
      _
    %p1216 = scmp.le.s32.totalorder 2, %s10
    // Predicated region
    $region45: #{matmul_bn_stats.1} parent=5 // pred_check
      %p1217 = pneg %p1216
    $region46: #{matmul_bn_stats.1} parent=5 // pred_check_branch
      %1219 = sbr.rel (%p1217) target = $region48
    $region47: #{matmul_bn_stats.1} parent=5 // pred_region
      %s1220 = ssub.s32 %s10, 2
      // Predicated region
      $region49: #{matmul_bn_stats.1} parent=47 // pred_check
        %p1221 = pneg %p116
      $region50: #{matmul_bn_stats.1} parent=47 // pred_check_branch
        %1223 = sbr.rel (%p1221) target = $region52
      $region51: #{matmul_bn_stats.1} parent=47 // pred_region
        %s1224 = smul.u32 32, %s23
        %p1225 = scmp.lt.s32.totalorder %s1224, 255
        %s1226 = scalar_select %p1225, %s1224, 255
        %p1227 = scmp.lt.s32.totalorder %s24, 0
        %s1228 = scalar_select %p1227, %s24, 0
        %s1229 = sadd.s32 %s1228, %s1226
        %s1230 = smul.addr %s1229, 4
        %s1231 = scalar_lea.vmem %s2, %s1230
      $region52: #{matmul_bn_stats.1} parent=47 // pred_fallthru
        _
      // Predicated region
      $region53: #{matmul_bn_stats.1} parent=47 // pred_check
        %p1232 = pneg %p144
      $region54: #{matmul_bn_stats.1} parent=47 // pred_check_branch
        %1234 = sbr.rel (%p1232) target = $region56
      $region55: #{matmul_bn_stats.1} parent=47 // pred_region
        %p1235 = scmp.lt.s32.totalorder %s23, 7
        %s1236 = scalar_select %p1235, %s23, 7
        %p1237 = scmp.lt.s32.totalorder %s24, 0
        %s1238 = scalar_select %p1237, %s24, 0
        %s1239 = sadd.s32 %s1238, %s1236
        %s1240 = smul.addr %s1239, 8
        %s1241 = scalar_lea.vmem %s3, %s1240
      $region56: #{matmul_bn_stats.1} parent=47 // pred_fallthru
        _
    $region48: #{matmul_bn_stats.1} parent=5 // pred_fallthru
      _
  $region6: #{matmul_bn_stats.1} parent=0 // loop_footer
    %s14 = sadd.s32 1, %s10
  $region7: #{matmul_bn_stats.1} parent=0 // loop_footer_branch
    %9 = sbr.rel target = $region3
  $region8: #{matmul_bn_stats.1} parent=0 // loop_exit
    _

</llo_original>
